<compile_context>
chip_gen: v7x
topology: tpu7x:2x2x1
jax: 0.10.0
libtpu: 0.0.40
codegen_flags: <defaults>
</compile_context>

<pallas_src>
import functools

import jax
import jax.numpy as jnp
from jax.experimental import pallas as pl
from jax.experimental.pallas import tpu as pltpu

_LANE = 128      # lane width (last-dim tiling unit)
_SUBLANE = 8     # sublane width (second-to-last-dim tiling unit)
_VMEM_TARGET = 40 << 20   # conservative working-set target (fits v7x's 64 MiB)


def _round_up(n, m):
    return ((n + m - 1) // m) * m


def _cdiv(a, b):
    return -(-a // b)


def _maybe_lane_pad(d):
    """Lane-pad a feature dim only when the extra traffic is <= ~12.5%.

    Small dims (e.g. 32) stay unpadded: in the mem-bound regime the extra
    x-in/out HBM bytes from padding cost far more than masked stores."""
    dp = _round_up(d, _LANE)
    return dp if dp * 8 <= d * 9 else d


def _block_kernel(x_ref, w0_ref, b0_ref, w1_ref, b1_ref, o_ref, acc_ref, *,
                  compute_dtype):
    """Grid = (batch tiles, hidden chunks).  Per step (i, j):
         acc[i] += relu(x[i] @ w0[:, j] + b0[j]) @ w1[j, :]
       finalized on the last hidden chunk with the residual and b1."""
    j = pl.program_id(1)

    @pl.when(j == 0)
    def _():
        acc_ref[...] = jnp.zeros_like(acc_ref)

    xc = x_ref[...].astype(compute_dtype)
    # linear0 chunk + ReLU (MXU, f32 accumulation); weights pre-cast in wrapper.
    h = jnp.dot(xc, w0_ref[...], preferred_element_type=jnp.float32)
    h = jnp.maximum(h + b0_ref[...], 0.0)
    # linear1 chunk, accumulated in f32.
    acc_ref[...] += jnp.dot(h.astype(compute_dtype), w1_ref[...],
                            preferred_element_type=jnp.float32)

    @pl.when(j == pl.num_programs(1) - 1)
    def _():
        o_ref[...] = (x_ref[...].astype(jnp.float32) + acc_ref[...]
                      + b1_ref[...]).astype(o_ref.dtype)


def block_forward(x, w0, b0, w1, b1, *, tile_b=512, tile_h=512,
                  compute_dtype=jnp.float32):
    """x: (B, in_dim); w0: (in_dim, out_dim); b0: (out_dim,) or (1, out_dim);
       w1: (out_dim, in_dim); b1: (in_dim,) or (1, in_dim)."""
    B, in_dim = x.shape
    out_dim = w0.shape[1]
    orig_dtype = x.dtype
    act_itemsize = jnp.dtype(orig_dtype).itemsize
    w_itemsize = jnp.dtype(compute_dtype).itemsize

    # --- feature dim: lane-pad only when (nearly) aligned already -----------
    in_p = _maybe_lane_pad(in_dim)

    # --- hidden dim: one full-extent chunk if it fits, else 128-mult chunks --
    def w_chunk_bytes(th):
        # w0 + w1 chunk, double-buffered by the BlockSpec pipeline
        return 2 * (2 * in_p * th) * w_itemsize

    if out_dim <= tile_h and w_chunk_bytes(out_dim) <= _VMEM_TARGET // 2:
        tile_h_eff, out_p, n_h = out_dim, out_dim, 1
    else:
        n_h0 = max(1, _cdiv(out_dim, tile_h))
        tile_h_eff = _round_up(_cdiv(out_dim, n_h0), _LANE)
        while tile_h_eff > _LANE and w_chunk_bytes(tile_h_eff) > _VMEM_TARGET // 2:
            tile_h_eff = _round_up(tile_h_eff // 2, _LANE)
        n_h = _cdiv(out_dim, tile_h_eff)
        out_p = n_h * tile_h_eff

    # --- batch tile: fill MXU M-dim, >=2 grid steps when possible (v7x 2 TCs),
    #     and shrink to fit the VMEM budget --------------------------------
    tile_b = max(_SUBLANE, min(_round_up(tile_b, _SUBLANE), _round_up(B, _SUBLANE)))
    if B >= 2 * _SUBLANE:
        tile_b = min(tile_b, _round_up(_cdiv(B, 2), _SUBLANE))

    def vmem_bytes(tb):
        act = 2 * 2 * tb * in_p * act_itemsize    # x + out tiles, double-buffered
        acc = tb * in_p * 4                       # f32 accumulator scratch
        hid = 2 * tb * tile_h_eff * 4             # h intermediate (+ cast copy)
        bias = 2 * (tile_h_eff + in_p) * 4
        return w_chunk_bytes(tile_h_eff) + bias + act + acc + hid

    while tile_b > _SUBLANE and vmem_bytes(tile_b) > _VMEM_TARGET:
        tile_b = max(_SUBLANE, _round_up(tile_b // 2, _SUBLANE))
    B_p = _round_up(B, tile_b)
    n_b = B_p // tile_b

    # --- conditional padding: skip pad/slice HBM round-trips when aligned ---
    pad_b, pad_f, pad_h = B_p - B, in_p - in_dim, out_p - out_dim
    x_in = jnp.pad(x, ((0, pad_b), (0, pad_f))) if (pad_b or pad_f) else x
    b0 = jnp.reshape(b0, (1, -1))
    b1 = jnp.reshape(b1, (1, -1))
    if pad_f or pad_h:
        w0 = jnp.pad(w0, ((0, pad_f), (0, pad_h)))
        b0 = jnp.pad(b0, ((0, 0), (0, pad_h)))
        w1 = jnp.pad(w1, ((0, pad_h), (0, pad_f)))
        b1 = jnp.pad(b1, ((0, 0), (0, pad_f)))
    # Pre-cast once in the wrapper: no per-grid-step casts of full weight tiles.
    w0c = w0.astype(compute_dtype)
    w1c = w1.astype(compute_dtype)
    b0c = b0.astype(jnp.float32)
    b1c = b1.astype(jnp.float32)

    vmem_limit = int(min(max(1.5 * vmem_bytes(tile_b), 32 << 20), 64 << 20))

    flops = 2 * 2 * B_p * in_p * out_p
    w_stream = 1 if n_h == 1 else n_b   # weights re-streamed per batch tile only when chunked
    bytes_accessed = (2 * B_p * in_p * act_itemsize
                      + w_stream * 2 * in_p * out_p * w_itemsize
                      + (in_p + out_p) * 4)

    out_padded = pl.pallas_call(
        functools.partial(_block_kernel, compute_dtype=compute_dtype),
        out_shape=jax.ShapeDtypeStruct((B_p, in_p), orig_dtype),
        grid=(n_b, n_h),
        in_specs=[
            pl.BlockSpec((tile_b, in_p), lambda i, j: (i, 0)),       # x tile
            pl.BlockSpec((in_p, tile_h_eff), lambda i, j: (0, j)),   # w0 chunk
            pl.BlockSpec((1, tile_h_eff), lambda i, j: (0, j)),      # b0 chunk
            pl.BlockSpec((tile_h_eff, in_p), lambda i, j: (j, 0)),   # w1 chunk
            pl.BlockSpec((1, in_p), lambda i, j: (0, 0)),            # b1
        ],
        out_specs=pl.BlockSpec((tile_b, in_p), lambda i, j: (i, 0)),
        scratch_shapes=[pltpu.VMEM((tile_b, in_p), jnp.float32)],
        compiler_params=pltpu.CompilerParams(
            dimension_semantics=("parallel", "arbitrary"),
            vmem_limit_bytes=vmem_limit),
        cost_estimate=pl.CostEstimate(flops=int(flops), transcendentals=0,
                                      bytes_accessed=int(bytes_accessed)),
        # TODO(synk): single-buffer the constant-index weight specs
        # (pipeline_mode=pl.Buffered(1)) once supported by the top-level
        # pallas_call pipeliner; would halve weight VMEM residency on v7x.
    )(x_in, w0c, b0c, w1c, b1c)

    return out_padded[:B, :in_dim] if (pad_b or pad_f) else out_padded


def init_params(key, in_dim, out_dim, dtype=jnp.float32):
    # Deterministic init mimicking nn.Linear's U(-1/sqrt(fan_in), 1/sqrt(fan_in)).
    k0, k1, k2, k3 = jax.random.split(key, 4)
    lim0 = 1.0 / jnp.sqrt(in_dim)
    lim1 = 1.0 / jnp.sqrt(out_dim)
    w0 = jax.random.uniform(k0, (in_dim, out_dim), dtype, -lim0, lim0)
    b0 = jax.random.uniform(k1, (1, out_dim), dtype, -lim0, lim0)
    w1 = jax.random.uniform(k2, (out_dim, in_dim), dtype, -lim1, lim1)
    b1 = jax.random.uniform(k3, (1, in_dim), dtype, -lim1, lim1)
    return w0, b0, w1, b1


if __name__ == "__main__":
    key = jax.random.PRNGKey(0)
    k_x, k_p, k_x2, k_p2 = jax.random.split(key, 4)

    # Case 1: the module's toy configuration (small, unpadded feature dims).
    B, in_dim, out_dim = 8, 32, 64
    x = jax.random.normal(k_x, (B, in_dim), jnp.float32)
    w0, b0, w1, b1 = init_params(k_p, in_dim, out_dim)
    ref = x + (jnp.maximum(x @ w0 + b0, 0.0) @ w1 + b1)

    out = jax.jit(block_forward)(x, w0, b0, w1, b1)
    jax.block_until_ready(out)
    assert out.shape == (B, in_dim)
    assert jnp.allclose(out, ref, atol=1e-5, rtol=1e-5)

    # bf16 MXU-input / f32-accumulate path (v5e/v6e/v7x recommendation).
    out_bf16 = jax.jit(functools.partial(block_forward, compute_dtype=jnp.bfloat16))(
        x, w0, b0, w1, b1)
    jax.block_until_ready(out_bf16)
    assert out_bf16.shape == (B, in_dim)
    assert bool(jnp.all(jnp.isfinite(out_bf16)))
    assert jnp.allclose(out_bf16, ref, atol=0.25, rtol=0.05)

    # Case 2: exercises batch tiling + hidden-dim chunking (accumulator path).
    B2, in2, out2 = 48, 128, 384
    x2 = jax.random.normal(k_x2, (B2, in2), jnp.float32)
    w0b, b0b, w1b, b1b = init_params(k_p2, in2, out2)
    ref2 = x2 + (jnp.maximum(x2 @ w0b + b0b, 0.0) @ w1b + b1b)
    out2_ = jax.jit(functools.partial(block_forward, tile_h=128))(
        x2, w0b, b0b, w1b, b1b)
    jax.block_until_ready(out2_)
    assert out2_.shape == (B2, in2)
    assert jnp.allclose(out2_, ref2, atol=1e-4, rtol=1e-4)

    print("KERNEL_OK")
</pallas_src>

<mosaic_0001>
module attributes {stable_mosaic.version = 11 : i64} {
  func.func @_block_kernel(%arg0: i32, %arg1: i32, %arg2: memref<8x32xf32, #tpu.memory_space<vmem>>, %arg3: memref<32x64xf32, #tpu.memory_space<vmem>>, %arg4: memref<1x64xf32, #tpu.memory_space<vmem>>, %arg5: memref<64x32xf32, #tpu.memory_space<vmem>>, %arg6: memref<1x32xf32, #tpu.memory_space<vmem>>, %arg7: memref<8x32xf32, #tpu.memory_space<vmem>>, %arg8: memref<8x32xf32, #tpu.memory_space<vmem>>) attributes {dimension_semantics = [#tpu.dimension_semantics<parallel>, #tpu.dimension_semantics<arbitrary>], iteration_bounds = array<i64: 1, 1>, scalar_prefetch = 0 : i64, scratch_operands = 1 : i64, tpu.core_type = #tpu.core_type<tc>, window_params = [{transform_indices = @transform_0, window_bounds = array<i64: 8, 32>}, {transform_indices = @transform_1, window_bounds = array<i64: 32, 64>}, {transform_indices = @transform_2, window_bounds = array<i64: 1, 64>}, {transform_indices = @transform_3, window_bounds = array<i64: 64, 32>}, {pipeline_mode = #tpu.pipeline_mode<synchronous>, transform_indices = @transform_4, window_bounds = array<i64: 1, 32>}, {transform_indices = @transform_5, window_bounds = array<i64: 8, 32>}]} {
    %c0_i32 = arith.constant 0 : i32
    %0 = arith.cmpi eq, %arg1, %c0_i32 : i32
    %1 = arith.extui %0 : i1 to i32
    %c0_i32_0 = arith.constant 0 : i32
    %2 = arith.cmpi ne, %1, %c0_i32_0 : i32
    scf.if %2 {
      %cst_16 = arith.constant 0.000000e+00 : f32
      %19 = vector.broadcast %cst_16 : f32 to vector<8x32xf32>
      %c0_17 = arith.constant 0 : index
      %c0_18 = arith.constant 0 : index
      %20 = vector.load %arg8[%c0_17, %c0_18] : memref<8x32xf32, #tpu.memory_space<vmem>>, vector<8x32xf32>
      tpu.vector_store %arg8[%c0_17, %c0_18], %19 {strides = array<i32>} : memref<8x32xf32, #tpu.memory_space<vmem>>, vector<8x32xf32>,
    } else {
    }
    %c0 = arith.constant 0 : index
    %c0_1 = arith.constant 0 : index
    %3 = vector.load %arg2[%c0, %c0_1] : memref<8x32xf32, #tpu.memory_space<vmem>>, vector<8x32xf32>
    %c0_2 = arith.constant 0 : index
    %c0_3 = arith.constant 0 : index
    %4 = vector.load %arg3[%c0_2, %c0_3] : memref<32x64xf32, #tpu.memory_space<vmem>>, vector<32x64xf32>
    %cst = arith.constant dense<0.000000e+00> : vector<8x64xf32>
    %5 = tpu.matmul %3, %4, %cst {dimension_numbers = #tpu.dot_dimension_numbers<[1], [0], [0], [1], [0, 0, 1, 1], [], []>} : vector<8x32xf32>, vector<32x64xf32>, vector<8x64xf32> -> vector<8x64xf32>
    %c0_4 = arith.constant 0 : index
    %c0_5 = arith.constant 0 : index
    %6 = vector.load %arg4[%c0_4, %c0_5] : memref<1x64xf32, #tpu.memory_space<vmem>>, vector<1x64xf32>
    %7 = vector.broadcast %6 : vector<1x64xf32> to vector<8x64xf32>
    %8 = arith.addf %5, %7 : vector<8x64xf32>
    %cst_6 = arith.constant 0.000000e+00 : f32
    %9 = vector.broadcast %cst_6 : f32 to vector<8x64xf32>
    %10 = arith.maximumf %8, %9 : vector<8x64xf32>
    %c0_7 = arith.constant 0 : index
    %c0_8 = arith.constant 0 : index
    %11 = vector.load %arg8[%c0_7, %c0_8] : memref<8x32xf32, #tpu.memory_space<vmem>>, vector<8x32xf32>
    %c0_9 = arith.constant 0 : index
    %c0_10 = arith.constant 0 : index
    %12 = vector.load %arg5[%c0_9, %c0_10] : memref<64x32xf32, #tpu.memory_space<vmem>>, vector<64x32xf32>
    %cst_11 = arith.constant dense<0.000000e+00> : vector<8x32xf32>
    %13 = tpu.matmul %10, %12, %cst_11 {dimension_numbers = #tpu.dot_dimension_numbers<[1], [0], [0], [1], [0, 0, 1, 1], [], []>} : vector<8x64xf32>, vector<64x32xf32>, vector<8x32xf32> -> vector<8x32xf32>
    %14 = arith.addf %11, %13 : vector<8x32xf32>
    %c0_12 = arith.constant 0 : index
    %c0_13 = arith.constant 0 : index
    %15 = vector.load %arg8[%c0_12, %c0_13] : memref<8x32xf32, #tpu.memory_space<vmem>>, vector<8x32xf32>
    tpu.vector_store %arg8[%c0_12, %c0_13], %14 {strides = array<i32>} : memref<8x32xf32, #tpu.memory_space<vmem>>, vector<8x32xf32>,
    %c0_i32_14 = arith.constant 0 : i32
    %16 = arith.cmpi eq, %arg1, %c0_i32_14 : i32
    %17 = arith.extui %16 : i1 to i32
    %c0_i32_15 = arith.constant 0 : i32
    %18 = arith.cmpi ne, %17, %c0_i32_15 : i32
    scf.if %18 {
      %c0_16 = arith.constant 0 : index
      %c0_17 = arith.constant 0 : index
      %19 = vector.load %arg2[%c0_16, %c0_17] : memref<8x32xf32, #tpu.memory_space<vmem>>, vector<8x32xf32>
      %c0_18 = arith.constant 0 : index
      %c0_19 = arith.constant 0 : index
      %20 = vector.load %arg8[%c0_18, %c0_19] : memref<8x32xf32, #tpu.memory_space<vmem>>, vector<8x32xf32>
      %21 = arith.addf %19, %20 : vector<8x32xf32>
      %c0_20 = arith.constant 0 : index
      %c0_21 = arith.constant 0 : index
      %22 = vector.load %arg6[%c0_20, %c0_21] : memref<1x32xf32, #tpu.memory_space<vmem>>, vector<1x32xf32>
      %23 = vector.broadcast %22 : vector<1x32xf32> to vector<8x32xf32>
      %24 = arith.addf %21, %23 : vector<8x32xf32>
      %c0_22 = arith.constant 0 : index
      %c0_23 = arith.constant 0 : index
      %25 = vector.load %arg7[%c0_22, %c0_23] : memref<8x32xf32, #tpu.memory_space<vmem>>, vector<8x32xf32>
      tpu.vector_store %arg7[%c0_22, %c0_23], %24 {strides = array<i32>} : memref<8x32xf32, #tpu.memory_space<vmem>>, vector<8x32xf32>,
    } else {
    }
    return
  }
  func.func @transform_0(%arg0: i32, %arg1: i32) -> (i32, i32) {
    %c0_i32 = arith.constant 0 : i32
    %c0_i32_0 = arith.constant 0 : i32
    return %arg0, %c0_i32 : i32, i32
  }
  func.func @transform_1(%arg0: i32, %arg1: i32) -> (i32, i32) {
    %c0_i32 = arith.constant 0 : i32
    %c0_i32_0 = arith.constant 0 : i32
    return %c0_i32, %arg1 : i32, i32
  }
  func.func @transform_2(%arg0: i32, %arg1: i32) -> (i32, i32) {
    %c0_i32 = arith.constant 0 : i32
    %c0_i32_0 = arith.constant 0 : i32
    return %c0_i32, %arg1 : i32, i32
  }
  func.func @transform_3(%arg0: i32, %arg1: i32) -> (i32, i32) {
    %c0_i32 = arith.constant 0 : i32
    %c0_i32_0 = arith.constant 0 : i32
    return %arg1, %c0_i32 : i32, i32
  }
  func.func @transform_4(%arg0: i32, %arg1: i32) -> (i32, i32) {
    %c0_i32 = arith.constant 0 : i32
    %c0_i32_0 = arith.constant 0 : i32
    %c0_i32_1 = arith.constant 0 : i32
    return %c0_i32, %c0_i32_0 : i32, i32
  }
  func.func @transform_5(%arg0: i32, %arg1: i32) -> (i32, i32) {
    %c0_i32 = arith.constant 0 : i32
    %c0_i32_0 = arith.constant 0 : i32
    return %arg0, %c0_i32 : i32, i32
  }
}

</mosaic_0001>

<llo_original>
// kernel: block_forward.1
$region0: #{block_forward.1}
  #allocation0 [shape = 'u32[]', space=smem, size = 0x4, offset = 0x4, fixed_abs, tag = 'smem constant byte address 0x4 - core index']
  #allocation1 [shape = 'u32[144,128]{1,0:T(1,128)}', space=vmem, size = 0x12000, scoped, tag = 'internal scratch']
  #allocation2 [shape = 'f32[8,32]{1,0:T(8,128)}', space=vmem, size = 0x1000, scoped, tag = 'scratch operand']
  %s0 = inlined_call_operand.vmem [shape: f32[8,32], index: 0, kind: input, shape index: {}]
  %s1 = inlined_call_operand.vmem [shape: f32[32,64], index: 1, kind: input, shape index: {}]
  %s2 = inlined_call_operand.vmem [shape: f32[1,64], index: 2, kind: input, shape index: {}]
  %s3 = inlined_call_operand.vmem [shape: f32[64,32], index: 3, kind: input, shape index: {}]
  %s4 = inlined_call_operand.vmem [shape: f32[1,32], index: 4, kind: input, shape index: {}]
  %s5 = inlined_call_operand.hbm [shape: f32[8,32], index: 5, kind: output, shape index: {}]
  %s6 = sld [smem:[#allocation0]]
  $region38: #{block_forward.1} parent=0
    _
  %s8 = ssub.s32 1, %s6
  %s9 = scalar_select 0, %s8, %s6
  $region1: #{block_forward.1} parent=0
    #allocation3 [shape = 'u8[4096]{0}', space=vmem, size = 0x1000, scoped, tag = 'output window, operand 0, single buffered']
    #allocation4 [shape = 's32[1]{0}', space=sflag, size = 0x4, scoped, tag = 'scoped memory for block_forward.1']
    %10 = vsyncpa [#allocation4], 0
    // Predicated region
    $region2: #{block_forward.1} parent=1 // pred_check
      _
    $region3: #{block_forward.1} parent=1 // pred_check_branch
      %12 = sbr.rel (0) target = $region5
    $region4: #{block_forward.1} parent=1 // pred_region
      _
    $region5: #{block_forward.1} parent=1 // pred_fallthru
      _
    // Predicated region
    $region6: #{block_forward.1} parent=1 // pred_check
      _
    $region7: #{block_forward.1} parent=1 // pred_check_branch
      %14 = sbr.rel (0) target = $region9
    $region8: #{block_forward.1} parent=1 // pred_region
      _
    $region9: #{block_forward.1} parent=1 // pred_fallthru
      _
    // Predicated region
    $region10: #{block_forward.1} parent=1 // pred_check
      _
    $region11: #{block_forward.1} parent=1 // pred_check_branch
      %16 = sbr.rel (0) target = $region13
    $region12: #{block_forward.1} parent=1 // pred_region
      _
    $region13: #{block_forward.1} parent=1 // pred_fallthru
      _
    // Predicated region
    $region14: #{block_forward.1} parent=1 // pred_check
      _
    $region15: #{block_forward.1} parent=1 // pred_check_branch
      %18 = sbr.rel (0) target = $region17
    $region16: #{block_forward.1} parent=1 // pred_region
      _
    $region17: #{block_forward.1} parent=1 // pred_fallthru
      _
    // Predicated region
    $region18: #{block_forward.1} parent=1 // pred_check
      _
    $region19: #{block_forward.1} parent=1 // pred_check_branch
      %20 = sbr.rel (0) target = $region21
    $region20: #{block_forward.1} parent=1 // pred_region
      _
    $region21: #{block_forward.1} parent=1 // pred_fallthru
      _
    %p21 = scmp.eq.s32.totalorder 0, 0
    // Predicated region
    $region22: #{block_forward.1} parent=1 // pred_check
      %p22 = pneg %p21
    $region23: #{block_forward.1} parent=1 // pred_check_branch
      %24 = sbr.rel (%p22) target = $region25
    $region24: #{block_forward.1} parent=1 // pred_region
      %vm25 = vcmask 261120
      %26 = vst.msk [vmem:[#allocation2] sm:$0xff] %vm25, 0.0
    $region25: #{block_forward.1} parent=1 // pred_fallthru
      _
    %v27 = vld [vmem:[%s0] sm:$0xff]
    %v28 = vld [vmem:[%s1] sm:$0xff]
    %v29 = vld [vmem:[%s1 + $0x8] sm:$0xff]
    %v30 = vld [vmem:[%s1 + $0x10] sm:$0xff]
    %v31 = vld [vmem:[%s1 + $0x18] sm:$0xff]
    %v32 = vld [vmem:[%s2] sm:$0x1]
    %v34 = vlaneseq
    %v35 = vshrl.u32 %v34, 7
    %v36 = vsub.s32 0, %v35
    %v37 = vrot.slane %v32, %v36
    %vm39 = vcmask 261120
    %v41 = vsel %vm39, %v27, 0
    %43 = vmatprep.subr.mxu0 0.0
    %44 = vmatpush1.msra.mxu0 %v28
    %45 = vmatprep.subr.mxu0 0.0
    %46 = vmatpush1.msra.mxu0 %v29
    %47 = vmatprep.subr.mxu0 0.0
    %48 = vmatpush1.msra.mxu0 %v30
    %49 = vmatprep.subr.mxu0 0.0
    %50 = vmatpush1.msra.mxu0 %v31
    %51 = vmatprep.subr.mxu0 0.0
    %52 = vmatpush1.msra.mxu0 0.0
    %53 = vmatprep.subr.mxu0 0.0
    %54 = vmatpush1.msra.mxu0 0.0
    %55 = vmatprep.subr.mxu0 0.0
    %56 = vmatpush1.msra.mxu0 0.0
    %57 = vmatprep.subr.mxu0 0.0
    %58 = vmatpush1.msra.mxu0 0.0
    %59 = vmatprep.subr.mxu0 0.0
    %60 = vmatpush1.msra.mxu0 0.0
    %61 = vmatprep.subr.mxu0 0.0
    %62 = vmatpush1.msra.mxu0 0.0
    %63 = vmatprep.subr.mxu0 0.0
    %64 = vmatpush1.msra.mxu0 0.0
    %65 = vmatprep.subr.mxu0 0.0
    %66 = vmatpush1.msra.mxu0 0.0
    %67 = vmatprep.subr.mxu0 0.0
    %68 = vmatpush1.msra.mxu0 0.0
    %69 = vmatprep.subr.mxu0 0.0
    %70 = vmatpush1.msra.mxu0 0.0
    %71 = vmatprep.subr.mxu0 0.0
    %72 = vmatpush1.msra.mxu0 0.0
    %73 = vmatprep.subr.mxu0 0.0
    %74 = vmatpush1.msra.mxu0 0.0
    %75 = vmatprep.subr.mxu0 0.0
    %76 = vmatpush1.msra.mxu0 0.0
    %77 = vmatprep.subr.mxu0 0.0
    %78 = vmatpush1.msra.mxu0 0.0
    %79 = vmatprep.subr.mxu0 0.0
    %80 = vmatpush1.msra.mxu0 0.0
    %81 = vmatprep.subr.mxu0 0.0
    %82 = vmatpush1.msra.mxu0 0.0
    %83 = vmatprep.subr.mxu0 0.0
    %84 = vmatpush1.msra.mxu0 0.0
    %85 = vmatprep.subr.mxu0 0.0
    %86 = vmatpush1.msra.mxu0 0.0
    %87 = vmatprep.subr.mxu0 0.0
    %88 = vmatpush1.msra.mxu0 0.0
    %89 = vmatprep.subr.mxu0 0.0
    %90 = vmatpush1.msra.mxu0 0.0
    %91 = vmatprep.subr.mxu0 0.0
    %92 = vmatpush1.msra.mxu0 0.0
    %93 = vmatprep.subr.mxu0 0.0
    %94 = vmatpush1.msra.mxu0 0.0
    %95 = vmatprep.subr.mxu0 0.0
    %96 = vmatpush1.msra.mxu0 0.0
    %97 = vmatprep.subr.mxu0 0.0
    %98 = vmatpush1.msra.mxu0 0.0
    %99 = vmatprep.subr.mxu0 0.0
    %100 = vmatpush1.msra.mxu0 0.0
    %101 = vmatprep.subr.mxu0 0.0
    %102 = vmatpush1.msra.mxu0 0.0
    %103 = vmatprep.subr.mxu0 0.0
    %104 = vmatpush1.msra.mxu0 0.0
    %105 = vmatprep.subr.mxu0 0.0
    %106 = vmatpush1.msra.mxu0 0.0
    %107 = vmatprep.mubr.f32.mxu0 0.0
    %108 = vmatmul.mubr.f32.gmra.mrb[0].mxu0 %v41
    %v109 = vpop.f32.mrb[0].mxu0
    %v110 = vadd.f32 %v37, %v109
    %v111 = vpop.f32.mrb[0].mxu0
    %112 = vdwg.mxu0
    %v113 = vmax.f32 %v110, 0.0
    %v114 = vld [vmem:[#allocation2] sm:$0xff]
    %v115 = vld [vmem:[%s3] sm:$0xff]
    %v116 = vld [vmem:[%s3 + $0x8] sm:$0xff]
    %v117 = vld [vmem:[%s3 + $0x10] sm:$0xff]
    %v118 = vld [vmem:[%s3 + $0x18] sm:$0xff]
    %v119 = vld [vmem:[%s3 + $0x20] sm:$0xff]
    %v120 = vld [vmem:[%s3 + $0x28] sm:$0xff]
    %v121 = vld [vmem:[%s3 + $0x30] sm:$0xff]
    %v122 = vld [vmem:[%s3 + $0x38] sm:$0xff]
    %vm123 = vcmask 523264
    %v125 = vsel %vm123, %v113, 0
    %127 = vmatprep.subr.mxu0 0.0
    %128 = vmatpush1.msra.mxu0 %v115
    %129 = vmatprep.subr.mxu0 0.0
    %130 = vmatpush1.msra.mxu0 %v116
    %131 = vmatprep.subr.mxu0 0.0
    %132 = vmatpush1.msra.mxu0 %v117
    %133 = vmatprep.subr.mxu0 0.0
    %134 = vmatpush1.msra.mxu0 %v118
    %135 = vmatprep.subr.mxu0 0.0
    %136 = vmatpush1.msra.mxu0 %v119
    %137 = vmatprep.subr.mxu0 0.0
    %138 = vmatpush1.msra.mxu0 %v120
    %139 = vmatprep.subr.mxu0 0.0
    %140 = vmatpush1.msra.mxu0 %v121
    %141 = vmatprep.subr.mxu0 0.0
    %142 = vmatpush1.msra.mxu0 %v122
    %143 = vmatprep.subr.mxu0 0.0
    %144 = vmatpush1.msra.mxu0 0.0
    %145 = vmatprep.subr.mxu0 0.0
    %146 = vmatpush1.msra.mxu0 0.0
    %147 = vmatprep.subr.mxu0 0.0
    %148 = vmatpush1.msra.mxu0 0.0
    %149 = vmatprep.subr.mxu0 0.0
    %150 = vmatpush1.msra.mxu0 0.0
    %151 = vmatprep.subr.mxu0 0.0
    %152 = vmatpush1.msra.mxu0 0.0
    %153 = vmatprep.subr.mxu0 0.0
    %154 = vmatpush1.msra.mxu0 0.0
    %155 = vmatprep.subr.mxu0 0.0
    %156 = vmatpush1.msra.mxu0 0.0
    %157 = vmatprep.subr.mxu0 0.0
    %158 = vmatpush1.msra.mxu0 0.0
    %159 = vmatprep.subr.mxu0 0.0
    %160 = vmatpush1.msra.mxu0 0.0
    %161 = vmatprep.subr.mxu0 0.0
    %162 = vmatpush1.msra.mxu0 0.0
    %163 = vmatprep.subr.mxu0 0.0
    %164 = vmatpush1.msra.mxu0 0.0
    %165 = vmatprep.subr.mxu0 0.0
    %166 = vmatpush1.msra.mxu0 0.0
    %167 = vmatprep.subr.mxu0 0.0
    %168 = vmatpush1.msra.mxu0 0.0
    %169 = vmatprep.subr.mxu0 0.0
    %170 = vmatpush1.msra.mxu0 0.0
    %171 = vmatprep.subr.mxu0 0.0
    %172 = vmatpush1.msra.mxu0 0.0
    %173 = vmatprep.subr.mxu0 0.0
    %174 = vmatpush1.msra.mxu0 0.0
    %175 = vmatprep.subr.mxu0 0.0
    %176 = vmatpush1.msra.mxu0 0.0
    %177 = vmatprep.subr.mxu0 0.0
    %178 = vmatpush1.msra.mxu0 0.0
    %179 = vmatprep.subr.mxu0 0.0
    %180 = vmatpush1.msra.mxu0 0.0
    %181 = vmatprep.subr.mxu0 0.0
    %182 = vmatpush1.msra.mxu0 0.0
    %183 = vmatprep.subr.mxu0 0.0
    %184 = vmatpush1.msra.mxu0 0.0
    %185 = vmatprep.subr.mxu0 0.0
    %186 = vmatpush1.msra.mxu0 0.0
    %187 = vmatprep.subr.mxu0 0.0
    %188 = vmatpush1.msra.mxu0 0.0
    %189 = vmatprep.subr.mxu0 0.0
    %190 = vmatpush1.msra.mxu0 0.0
    %191 = vmatprep.mubr.f32.mxu0 0.0
    %192 = vmatmul.mubr.f32.gmra.mrb[0].mxu0 %v125
    %v193 = vpop.f32.mrb[0].mxu0
    %v194 = vadd.f32 0.0, %v193
    %v195 = vpop.f32.mrb[0].mxu0
    %196 = vdwg.mxu0
    %v197 = vadd.f32 %v114, %v194
    %198 = vst.msk [vmem:[#allocation2] sm:$0xff] %vm39, %v197
    // Predicated region
    $region26: #{block_forward.1} parent=1 // pred_check
      %p199 = pneg %p21
    $region27: #{block_forward.1} parent=1 // pred_check_branch
      %201 = sbr.rel (%p199) target = $region29
    $region28: #{block_forward.1} parent=1 // pred_region
      %v202 = vld [vmem:[%s0] sm:$0xff]
      %v203 = vld [vmem:[#allocation2] sm:$0xff]
      %v204 = vadd.f32 %v202, %v203
      %v205 = vld [vmem:[%s4] sm:$0x1]
      %v207 = vlaneseq
      %v208 = vshrl.u32 %v207, 7
      %v209 = vsub.s32 0, %v208
      %v210 = vrot.slane %v205, %v209
      %v212 = vadd.f32 %v204, %v210
      %213 = vst.msk [vmem:[#allocation3] sm:$0xff] %vm39, %v212
    $region29: #{block_forward.1} parent=1 // pred_fallthru
      _
    // Predicated region
    $region30: #{block_forward.1} parent=1 // pred_check
      _
    $region31: #{block_forward.1} parent=1 // pred_check_branch
      %215 = sbr.rel (0) target = $region33
    $region32: #{block_forward.1} parent=1 // pred_region
      %s217 = ssub.s32 128, 128
      %218 = vsyncadd [#allocation4], %s217
      %s220 = sshll.u32 [#allocation3], 4
      %s221 = int_to_ptr.vmem [resolvable:$true] %s220
      %223 = dma.vmem_to_hbm [thread:$0]  %s221, 128, %s5, [#allocation4]
    $region33: #{block_forward.1} parent=1 // pred_fallthru
      _
    // Predicated region
    $region34: #{block_forward.1} parent=1 // pred_check
      _
    $region35: #{block_forward.1} parent=1 // pred_check_branch
      %225 = sbr.rel (0) target = $region37
    $region36: #{block_forward.1} parent=1 // pred_region
      %226 = dma.done [#allocation4], 128
    $region37: #{block_forward.1} parent=1 // pred_fallthru
      _
    %227 = vsyncpa [#allocation4], 1

</llo_original>
